<compile_context>
chip_gen: v6e
topology: v6e:2x2x1
jax: 0.10.0
libtpu: 0.0.40
codegen_flags: <defaults>
</compile_context>

<pallas_src>
import functools

import jax
import jax.numpy as jnp
from jax import lax
from jax.experimental import pallas as pl
from jax.experimental.pallas import tpu as pltpu


# ----------------------------------------------------------------------------
# Kernel: one attention direction (queries q, keys/values kv) + fusion output.
#   fusion = LeakyReLU( q @ W3a + softmax(q @ (kv @ Wk + bk)^T) @ kv @ W3b + b3 )
# ----------------------------------------------------------------------------
def _co_attn_dir_kernel(q_ref, kv_ref, wk_ref, bk_ref, w3a_ref, w3b_ref, b3_ref,
                        out_ref, pk_ref, *, sk_valid):
    GB, TQ, Dp = q_ref.shape
    _, Skp, _ = kv_ref.shape
    qt = pl.program_id(1)

    # Project keys once per batch block (query-tile axis is "arbitrary", so
    # the scratch cache is valid across the inner grid axis).
    @pl.when(qt == 0)
    def _():
        kv_flat = kv_ref[...].reshape(GB * Skp, Dp)
        proj = jnp.dot(kv_flat, wk_ref[...],
                       preferred_element_type=jnp.float32) + bk_ref[...]
        pk_ref[...] = proj.reshape(GB, Skp, Dp).astype(pk_ref.dtype)

    q = q_ref[...]                                              # (GB, TQ, Dp) bf16

    # scores = q @ proj_keys^T, expressed as a last-dim contraction (no XLU
    # transpose); f32 accumulation on the MXU.
    scores = lax.dot_general(q, pk_ref[...],
                             (((2,), (2,)), ((0,), (0,))),
                             preferred_element_type=jnp.float32)  # (GB, TQ, Skp)

    if sk_valid < Skp:  # static: mask zero-padded key columns before softmax
        key_idx = lax.broadcasted_iota(jnp.int32, (1, 1, Skp), 2)
        scores = jnp.where(key_idx < sk_valid, scores, jnp.float32(-1e30))

    m = jnp.max(scores, axis=-1, keepdims=True)
    e = jnp.exp(scores - m)
    denom = jnp.sum(e, axis=-1, keepdims=True)
    probs = (e * pl.reciprocal(denom, approx=True)).astype(jnp.bfloat16)

    att = lax.dot_general(probs, kv_ref[...],
                          (((2,), (1,)), ((0,), (0,))),
                          preferred_element_type=jnp.float32)     # (GB, TQ, Dp)

    # W3(cat(q, att)) == q @ W3a + att @ W3b + b3 ; then LeakyReLU(0.01).
    qf = q.reshape(GB * TQ, Dp)
    attf = att.reshape(GB * TQ, Dp).astype(jnp.bfloat16)
    h = (jnp.dot(qf, w3a_ref[...], preferred_element_type=jnp.float32)
         + jnp.dot(attf, w3b_ref[...], preferred_element_type=jnp.float32)
         + b3_ref[...])
    h = jnp.maximum(h, 0.01 * h)
    out_ref[...] = h.reshape(GB, TQ, Dp).astype(out_ref.dtype)


# ----------------------------------------------------------------------------
# VMEM planning (generation-aware).
# ----------------------------------------------------------------------------
def _round_up(x, m):
    return ((x + m - 1) // m) * m


def _vmem_caps():
    """Return (vmem_limit_bytes, planning_budget_bytes) for the local TPU."""
    phys = 64 * 1024 * 1024                     # v7x-safe fallback
    try:
        info = pltpu.get_tpu_info()
        phys = int(getattr(info, "vmem_capacity_bytes", phys)) or phys
    except Exception:
        pass
    limit = min((phys * 3) // 4, 100 * 1024 * 1024)   # ~48 MiB v7x, ~96 MiB v5e/v6e
    budget = max(limit - 8 * 1024 * 1024, 12 * 1024 * 1024)
    return limit, budget


def _vmem_estimate(GB, TQ, Skp, Dp, out_bytes):
    bf, f4 = 2, 4
    q_in = 2 * GB * TQ * Dp * bf                   # double-buffered query tiles
    kv_in = 2 * GB * Skp * Dp * bf                 # double-buffered key/value block
    pk = GB * Skp * Dp * bf                        # projected-key scratch (single)
    outb = 2 * GB * TQ * Dp * out_bytes            # double-buffered output tiles
    wts = 3 * Dp * Dp * bf + 2 * Dp * f4           # single-buffered weights/biases
    live = (GB * TQ * Skp * (f4 + bf)              # scores f32 + probs bf16
            + GB * TQ * Dp * (2 * f4 + bf))        # att f32, h f32, att bf16 cast
    return int(1.25 * (q_in + kv_in + pk + outb + wts + live))


def _plan(B, Sq, Sk, Dp, out_bytes, budget):
    Skp = _round_up(max(Sk, 8), 128)               # lane-dense score columns
    sq8 = _round_up(Sq, 8)
    if sq8 <= 256:
        TQ = sq8
    else:
        TQ = 256 if _round_up(Sq, 128) % 256 == 0 else 128
    while TQ > 128 and _vmem_estimate(1, TQ, Skp, Dp, out_bytes) > budget:
        TQ = max(128, TQ // 2)
    Sqp = _round_up(Sq, TQ)
    # Largest batch block that fits the budget; keep >=2 batch-parallel grid
    # steps when B >= 2 (megacore / v7x sharding is on the batch axis).
    gb_cap = B if B < 2 else max(1, B // 2)
    GB = 1
    for g in range(1, gb_cap + 1):
        if B % g:
            continue
        if _vmem_estimate(g, TQ, Skp, Dp, out_bytes) <= budget:
            GB = g
    return GB, TQ, Sqp, Skp


# ----------------------------------------------------------------------------
# One attention direction as a pallas_call.
# ----------------------------------------------------------------------------
def _attend_fuse(q, kv, wk, bk, w3a, w3b, b3, out_dtype,
                 vmem_limit, vmem_budget, interpret):
    B, Sq, Dp = q.shape
    _, Sk, _ = kv.shape
    out_bytes = jnp.dtype(out_dtype).itemsize
    GB, TQ, Sqp, Skp = _plan(B, Sq, Sk, Dp, out_bytes, vmem_budget)

    if Sqp > Sq:
        q = jnp.pad(q, ((0, 0), (0, Sqp - Sq), (0, 0)))
    if Skp > Sk:
        kv = jnp.pad(kv, ((0, 0), (0, Skp - Sk), (0, 0)))

    grid = (B // GB, Sqp // TQ)
    inv = lambda b, t: (0, 0)
    # Weights / biases never change across the grid -> single-buffer them.
    w_spec = pl.BlockSpec((Dp, Dp), inv, pipeline_mode=pl.Buffered(1))
    bias_spec = pl.BlockSpec((1, Dp), inv, pipeline_mode=pl.Buffered(1))

    kernel = functools.partial(_co_attn_dir_kernel, sk_valid=Sk)

    return pl.pallas_call(
        kernel,
        out_shape=jax.ShapeDtypeStruct((B, Sqp, Dp), out_dtype),
        grid_spec=pltpu.PrefetchScalarGridSpec(
            num_scalar_prefetch=0,
            grid=grid,
            in_specs=[pl.BlockSpec((GB, TQ, Dp), lambda b, t: (b, t, 0)),
                      pl.BlockSpec((GB, Skp, Dp), lambda b, t: (b, 0, 0)),
                      w_spec, bias_spec,       # Wk, bk
                      w_spec, w_spec,          # W3a, W3b
                      bias_spec],              # b3
            out_specs=pl.BlockSpec((GB, TQ, Dp), lambda b, t: (b, t, 0)),
            scratch_shapes=[pltpu.VMEM((GB, Skp, Dp), jnp.bfloat16)]),
        compiler_params=pltpu.CompilerParams(
            dimension_semantics=("parallel", "arbitrary"),
            vmem_limit_bytes=vmem_limit),
        interpret=interpret,
    )(q, kv, wk, bk, w3a, w3b, b3)


# ----------------------------------------------------------------------------
# Public wrapper: CoAttention forward.
# ----------------------------------------------------------------------------
def coattention(x1, x2, params, *, out_dtype=None, interpret=False):
    """x1: (B, S1, D), x2: (B, S2, D). Returns (fusion1, fusion2)."""
    B, S1, D = x1.shape
    B2, S2, D2 = x2.shape
    assert B == B2 and D == D2
    w1t, b1, w2t, b2, w3a, w3b, b3 = params
    out_dtype = out_dtype if out_dtype is not None else x1.dtype

    LANE = 128
    Dp = _round_up(D, LANE)
    dpad = Dp - D

    def pad_feat(a):
        return jnp.pad(a, ((0, 0),) * (a.ndim - 1) + ((0, dpad),)) if dpad else a

    def pad_w(w):
        return jnp.pad(w, ((0, dpad), (0, dpad))) if dpad else w

    # Zero feature padding is exact: padded input columns / weight rows+cols /
    # bias entries are zero, so padded output columns are exactly zero.
    # Inputs are cast to bf16 ONCE here (they are only used as MXU operands).
    x1b = pad_feat(x1).astype(jnp.bfloat16)
    x2b = pad_feat(x2).astype(jnp.bfloat16)
    w1p = pad_w(w1t).astype(jnp.bfloat16)
    w2p = pad_w(w2t).astype(jnp.bfloat16)
    w3ap = pad_w(w3a).astype(jnp.bfloat16)
    w3bp = pad_w(w3b).astype(jnp.bfloat16)
    b1p = pad_feat(b1).astype(jnp.float32)
    b2p = pad_feat(b2).astype(jnp.float32)
    b3p = pad_feat(b3).astype(jnp.float32)

    vmem_limit, vmem_budget = _vmem_caps()

    # Direction 1: queries = input1, keys/values = input2 projected by W1.
    f1 = _attend_fuse(x1b, x2b, w1p, b1p, w3ap, w3bp, b3p, out_dtype,
                      vmem_limit, vmem_budget, interpret)
    # Direction 2: queries = input2, keys/values = input1 projected by W2.
    f2 = _attend_fuse(x2b, x1b, w2p, b2p, w3ap, w3bp, b3p, out_dtype,
                      vmem_limit, vmem_budget, interpret)

    return f1[:, :S1, :D], f2[:, :S2, :D]


# ----------------------------------------------------------------------------
# Parameter init + references.
# ----------------------------------------------------------------------------
def init_params(key, D):
    """PyTorch-style nn.Linear init: U(-1/sqrt(fan_in), 1/sqrt(fan_in))."""
    ks = jax.random.split(key, 6)
    bnd1 = 1.0 / jnp.sqrt(D)
    bnd3 = 1.0 / jnp.sqrt(2 * D)
    # W1, W2: (out=D, in=D); W3: (out=D, in=2D). Stored transposed (in, out).
    w1t = jax.random.uniform(ks[0], (D, D), jnp.float32, -bnd1, bnd1)
    b1 = jax.random.uniform(ks[1], (1, D), jnp.float32, -bnd1, bnd1)
    w2t = jax.random.uniform(ks[2], (D, D), jnp.float32, -bnd1, bnd1)
    b2 = jax.random.uniform(ks[3], (1, D), jnp.float32, -bnd1, bnd1)
    w3t = jax.random.uniform(ks[4], (2 * D, D), jnp.float32, -bnd3, bnd3)
    b3 = jax.random.uniform(ks[5], (1, D), jnp.float32, -bnd3, bnd3)
    w3a, w3b = w3t[:D], w3t[D:]          # halves acting on [x, attended_x]
    return (w1t, b1, w2t, b2, w3a, w3b, b3)


def coattention_ref(x1, x2, params):
    """Exact f32 pure-JAX reference mirroring the PyTorch forward."""
    w1t, b1, w2t, b2, w3a, w3b, b3 = params
    p2 = x2 @ w1t + b1
    p1 = x1 @ w2t + b2
    a1 = jax.nn.softmax(jnp.einsum('bsd,btd->bst', x1, p2), axis=-1)
    a2 = jax.nn.softmax(jnp.einsum('btd,bsd->bts', x2, p1), axis=-1)
    att1 = a1 @ x2
    att2 = a2 @ x1
    f1 = x1 @ w3a + att1 @ w3b + b3
    f2 = x2 @ w3a + att2 @ w3b + b3
    lrelu = lambda h: jnp.maximum(h, 0.01 * h)
    return lrelu(f1), lrelu(f2)


def coattention_ref_bf16(x1, x2, params):
    """Reference mirroring the kernel's bf16-operand / f32-accumulate numerics."""
    w1t, b1, w2t, b2, w3a, w3b, b3 = params
    bf16, f32 = jnp.bfloat16, jnp.float32
    x1b, x2b = x1.astype(bf16), x2.astype(bf16)
    w1b, w2b = w1t.astype(bf16), w2t.astype(bf16)
    w3ab, w3bb = w3a.astype(bf16), w3b.astype(bf16)
    p2 = jnp.einsum('btd,de->bte', x2b, w1b, preferred_element_type=f32) + b1
    p1 = jnp.einsum('bsd,de->bse', x1b, w2b, preferred_element_type=f32) + b2
    s1 = jnp.einsum('bsd,btd->bst', x1b, p2.astype(bf16), preferred_element_type=f32)
    s2 = jnp.einsum('btd,bsd->bts', x2b, p1.astype(bf16), preferred_element_type=f32)
    a1 = jax.nn.softmax(s1, axis=-1).astype(bf16)
    a2 = jax.nn.softmax(s2, axis=-1).astype(bf16)
    att1 = jnp.einsum('bst,btd->bsd', a1, x2b, preferred_element_type=f32)
    att2 = jnp.einsum('bts,bsd->btd', a2, x1b, preferred_element_type=f32)

    def fuse(xb, att):
        h = (jnp.einsum('bsd,de->bse', xb, w3ab, preferred_element_type=f32)
             + jnp.einsum('bsd,de->bse', att.astype(bf16), w3bb,
                          preferred_element_type=f32)
             + b3)
        return jnp.maximum(h, 0.01 * h)

    return fuse(x1b, att1), fuse(x2b, att2)


if __name__ == "__main__":
    B, S1, S2, D = 2, 8, 16, 32
    key = jax.random.PRNGKey(0)
    k_x1, k_x2, k_p = jax.random.split(key, 3)
    x1 = jax.random.normal(k_x1, (B, S1, D), jnp.float32)
    x2 = jax.random.normal(k_x2, (B, S2, D), jnp.float32)
    params = init_params(k_p, D)

    f1, f2 = coattention(x1, x2, params)
    jax.block_until_ready((f1, f2))

    # Tight check vs a reference mirroring the kernel's bf16 MXU numerics.
    m1, m2 = coattention_ref_bf16(x1, x2, params)
    assert jnp.allclose(f1, m1, atol=2e-2, rtol=2e-2), float(jnp.max(jnp.abs(f1 - m1)))
    assert jnp.allclose(f2, m2, atol=2e-2, rtol=2e-2), float(jnp.max(jnp.abs(f2 - m2)))

    # Looser sanity check vs the exact f32 PyTorch-equivalent forward.
    r1, r2 = coattention_ref(x1, x2, params)
    assert jnp.allclose(f1, r1, atol=2e-1, rtol=2e-1), float(jnp.max(jnp.abs(f1 - r1)))
    assert jnp.allclose(f2, r2, atol=2e-1, rtol=2e-1), float(jnp.max(jnp.abs(f2 - r2)))

    print("KERNEL_OK")
</pallas_src>

<mosaic_0001>
module attributes {stable_mosaic.version = 11 : i64} {
  func.func @_co_attn_dir_kernel(%arg0: i32, %arg1: i32, %arg2: memref<1x8x128xbf16, #tpu.memory_space<vmem>>, %arg3: memref<1x128x128xbf16, #tpu.memory_space<vmem>>, %arg4: memref<128x128xbf16, #tpu.memory_space<vmem>>, %arg5: memref<1x128xf32, #tpu.memory_space<vmem>>, %arg6: memref<128x128xbf16, #tpu.memory_space<vmem>>, %arg7: memref<128x128xbf16, #tpu.memory_space<vmem>>, %arg8: memref<1x128xf32, #tpu.memory_space<vmem>>, %arg9: memref<1x8x128xf32, #tpu.memory_space<vmem>>, %arg10: memref<1x128x128xbf16, #tpu.memory_space<vmem>>) attributes {dimension_semantics = [#tpu.dimension_semantics<parallel>, #tpu.dimension_semantics<arbitrary>], iteration_bounds = array<i64: 2, 1>, scalar_prefetch = 0 : i64, scratch_operands = 1 : i64, tpu.core_type = #tpu.core_type<tc>, window_params = [{transform_indices = @transform_0, window_bounds = array<i64: 1, 8, 128>}, {transform_indices = @transform_1, window_bounds = array<i64: 1, 128, 128>}, {pipeline_mode = #tpu.pipeline_mode<synchronous>, transform_indices = @transform_2, window_bounds = array<i64: 128, 128>}, {pipeline_mode = #tpu.pipeline_mode<synchronous>, transform_indices = @transform_3, window_bounds = array<i64: 1, 128>}, {pipeline_mode = #tpu.pipeline_mode<synchronous>, transform_indices = @transform_4, window_bounds = array<i64: 128, 128>}, {pipeline_mode = #tpu.pipeline_mode<synchronous>, transform_indices = @transform_5, window_bounds = array<i64: 128, 128>}, {pipeline_mode = #tpu.pipeline_mode<synchronous>, transform_indices = @transform_6, window_bounds = array<i64: 1, 128>}, {transform_indices = @transform_7, window_bounds = array<i64: 1, 8, 128>}]} {
    %c0_i32 = arith.constant 0 : i32
    %0 = arith.cmpi eq, %arg1, %c0_i32 : i32
    %1 = arith.extui %0 : i1 to i32
    %c0_i32_0 = arith.constant 0 : i32
    %2 = arith.cmpi ne, %1, %c0_i32_0 : i32
    scf.if %2 {
      %c0_25 = arith.constant 0 : index
      %c0_26 = arith.constant 0 : index
      %c0_27 = arith.constant 0 : index
      %42 = vector.load %arg3[%c0_25, %c0_26, %c0_27] : memref<1x128x128xbf16, #tpu.memory_space<vmem>>, vector<1x128x128xbf16>
      %43 = vector.shape_cast %42 : vector<1x128x128xbf16> to vector<128x128xbf16>
      %c0_28 = arith.constant 0 : index
      %c0_29 = arith.constant 0 : index
      %44 = vector.load %arg4[%c0_28, %c0_29] : memref<128x128xbf16, #tpu.memory_space<vmem>>, vector<128x128xbf16>
      %cst_30 = arith.constant dense<0.000000e+00> : vector<128x128xf32>
      %45 = tpu.matmul %43, %44, %cst_30 {dimension_numbers = #tpu.dot_dimension_numbers<[1], [0], [0], [1], [0, 0, 1, 1], [], []>} : vector<128x128xbf16>, vector<128x128xbf16>, vector<128x128xf32> -> vector<128x128xf32>
      %c0_31 = arith.constant 0 : index
      %c0_32 = arith.constant 0 : index
      %46 = vector.load %arg5[%c0_31, %c0_32] : memref<1x128xf32, #tpu.memory_space<vmem>>, vector<1x128xf32>
      %47 = vector.broadcast %46 : vector<1x128xf32> to vector<128x128xf32>
      %48 = arith.addf %45, %47 : vector<128x128xf32>
      %49 = vector.shape_cast %48 : vector<128x128xf32> to vector<1x128x128xf32>
      %50 = arith.truncf %49 : vector<1x128x128xf32> to vector<1x128x128xbf16>
      %c0_33 = arith.constant 0 : index
      %c0_34 = arith.constant 0 : index
      %c0_35 = arith.constant 0 : index
      %51 = vector.load %arg10[%c0_33, %c0_34, %c0_35] : memref<1x128x128xbf16, #tpu.memory_space<vmem>>, vector<1x128x128xbf16>
      tpu.vector_store %arg10[%c0_33, %c0_34, %c0_35], %50 {strides = array<i32>} : memref<1x128x128xbf16, #tpu.memory_space<vmem>>, vector<1x128x128xbf16>,
    } else {
    }
    %c0 = arith.constant 0 : index
    %c0_1 = arith.constant 0 : index
    %c0_2 = arith.constant 0 : index
    %3 = vector.load %arg2[%c0, %c0_1, %c0_2] : memref<1x8x128xbf16, #tpu.memory_space<vmem>>, vector<1x8x128xbf16>
    %c0_3 = arith.constant 0 : index
    %c0_4 = arith.constant 0 : index
    %c0_5 = arith.constant 0 : index
    %4 = vector.load %arg10[%c0_3, %c0_4, %c0_5] : memref<1x128x128xbf16, #tpu.memory_space<vmem>>, vector<1x128x128xbf16>
    %cst = arith.constant dense<0.000000e+00> : vector<1x8x128xf32>
    %5 = tpu.matmul %3, %4, %cst {dimension_numbers = #tpu.dot_dimension_numbers<[2], [2], [1], [1], [0, 0, 0, 1, 1, 1], [0], [0]>} : vector<1x8x128xbf16>, vector<1x128x128xbf16>, vector<1x8x128xf32> -> vector<1x8x128xf32>
    %6 = tpu.iota {dimensions = array<i32: 2>} : vector<1x1x128xi32>
    %c16_i32 = arith.constant 16 : i32
    %7 = vector.broadcast %c16_i32 : i32 to vector<1x1x128xi32>
    %8 = arith.cmpi slt, %6, %7 : vector<1x1x128xi32>
    %cst_6 = arith.constant -1.000000e+30 : f32
    %9 = vector.shape_cast %8 : vector<1x1x128xi1> to vector<1x1x128xi1>
    %10 = vector.broadcast %9 : vector<1x1x128xi1> to vector<1x8x128xi1>
    %11 = vector.broadcast %cst_6 : f32 to vector<1x8x128xf32>
    %12 = arith.select %10, %5, %11 : vector<1x8x128xi1>, vector<1x8x128xf32>
    %cst_7 = arith.constant dense<0xFF800000> : vector<1x8xf32>
    %13 = vector.multi_reduction <maximumf>, %12, %cst_7 [2] : vector<1x8x128xf32> to vector<1x8xf32>
    %14 = vector.shape_cast %13 : vector<1x8xf32> to vector<1x8x1xf32>
    %15 = vector.broadcast %14 : vector<1x8x1xf32> to vector<1x8x128xf32>
    %16 = arith.subf %12, %15 : vector<1x8x128xf32>
    %17 = math.exp %16 : vector<1x8x128xf32>
    %cst_8 = arith.constant dense<0.000000e+00> : vector<1x8xf32>
    %18 = vector.multi_reduction <add>, %17, %cst_8 [2] : vector<1x8x128xf32> to vector<1x8xf32>
    %19 = vector.shape_cast %18 : vector<1x8xf32> to vector<1x8x1xf32>
    %20 = tpu.reciprocal %19 {approx = true} : vector<1x8x1xf32> -> vector<1x8x1xf32>
    %21 = vector.broadcast %20 : vector<1x8x1xf32> to vector<1x8x128xf32>
    %22 = arith.mulf %17, %21 : vector<1x8x128xf32>
    %23 = arith.truncf %22 : vector<1x8x128xf32> to vector<1x8x128xbf16>
    %c0_9 = arith.constant 0 : index
    %c0_10 = arith.constant 0 : index
    %c0_11 = arith.constant 0 : index
    %24 = vector.load %arg3[%c0_9, %c0_10, %c0_11] : memref<1x128x128xbf16, #tpu.memory_space<vmem>>, vector<1x128x128xbf16>
    %cst_12 = arith.constant dense<0.000000e+00> : vector<1x8x128xf32>
    %25 = tpu.matmul %23, %24, %cst_12 {dimension_numbers = #tpu.dot_dimension_numbers<[2], [1], [1], [2], [0, 0, 0, 1, 1, 2], [0], [0]>} : vector<1x8x128xbf16>, vector<1x128x128xbf16>, vector<1x8x128xf32> -> vector<1x8x128xf32>
    %26 = vector.shape_cast %3 : vector<1x8x128xbf16> to vector<8x128xbf16>
    %27 = vector.shape_cast %25 : vector<1x8x128xf32> to vector<8x128xf32>
    %28 = arith.truncf %27 : vector<8x128xf32> to vector<8x128xbf16>
    %c0_13 = arith.constant 0 : index
    %c0_14 = arith.constant 0 : index
    %29 = vector.load %arg6[%c0_13, %c0_14] : memref<128x128xbf16, #tpu.memory_space<vmem>>, vector<128x128xbf16>
    %cst_15 = arith.constant dense<0.000000e+00> : vector<8x128xf32>
    %30 = tpu.matmul %26, %29, %cst_15 {dimension_numbers = #tpu.dot_dimension_numbers<[1], [0], [0], [1], [0, 0, 1, 1], [], []>} : vector<8x128xbf16>, vector<128x128xbf16>, vector<8x128xf32> -> vector<8x128xf32>
    %c0_16 = arith.constant 0 : index
    %c0_17 = arith.constant 0 : index
    %31 = vector.load %arg7[%c0_16, %c0_17] : memref<128x128xbf16, #tpu.memory_space<vmem>>, vector<128x128xbf16>
    %cst_18 = arith.constant dense<0.000000e+00> : vector<8x128xf32>
    %32 = tpu.matmul %28, %31, %cst_18 {dimension_numbers = #tpu.dot_dimension_numbers<[1], [0], [0], [1], [0, 0, 1, 1], [], []>} : vector<8x128xbf16>, vector<128x128xbf16>, vector<8x128xf32> -> vector<8x128xf32>
    %33 = arith.addf %30, %32 : vector<8x128xf32>
    %c0_19 = arith.constant 0 : index
    %c0_20 = arith.constant 0 : index
    %34 = vector.load %arg8[%c0_19, %c0_20] : memref<1x128xf32, #tpu.memory_space<vmem>>, vector<1x128xf32>
    %35 = vector.broadcast %34 : vector<1x128xf32> to vector<8x128xf32>
    %36 = arith.addf %33, %35 : vector<8x128xf32>
    %cst_21 = arith.constant 0.00999999977 : f32
    %37 = vector.broadcast %cst_21 : f32 to vector<8x128xf32>
    %38 = arith.mulf %37, %36 : vector<8x128xf32>
    %39 = arith.maximumf %36, %38 : vector<8x128xf32>
    %40 = vector.shape_cast %39 : vector<8x128xf32> to vector<1x8x128xf32>
    %c0_22 = arith.constant 0 : index
    %c0_23 = arith.constant 0 : index
    %c0_24 = arith.constant 0 : index
    %41 = vector.load %arg9[%c0_22, %c0_23, %c0_24] : memref<1x8x128xf32, #tpu.memory_space<vmem>>, vector<1x8x128xf32>
    tpu.vector_store %arg9[%c0_22, %c0_23, %c0_24], %40 {strides = array<i32>} : memref<1x8x128xf32, #tpu.memory_space<vmem>>, vector<1x8x128xf32>,
    return
  }
  func.func @transform_0(%arg0: i32, %arg1: i32) -> (i32, i32, i32) {
    %c0_i32 = arith.constant 0 : i32
    %c0_i32_0 = arith.constant 0 : i32
    return %arg0, %arg1, %c0_i32 : i32, i32, i32
  }
  func.func @transform_1(%arg0: i32, %arg1: i32) -> (i32, i32, i32) {
    %c0_i32 = arith.constant 0 : i32
    %c0_i32_0 = arith.constant 0 : i32
    %c0_i32_1 = arith.constant 0 : i32
    return %arg0, %c0_i32, %c0_i32_0 : i32, i32, i32
  }
  func.func @transform_2(%arg0: i32, %arg1: i32) -> (i32, i32) {
    %c0_i32 = arith.constant 0 : i32
    %c0_i32_0 = arith.constant 0 : i32
    %c0_i32_1 = arith.constant 0 : i32
    return %c0_i32, %c0_i32_0 : i32, i32
  }
  func.func @transform_3(%arg0: i32, %arg1: i32) -> (i32, i32) {
    %c0_i32 = arith.constant 0 : i32
    %c0_i32_0 = arith.constant 0 : i32
    %c0_i32_1 = arith.constant 0 : i32
    return %c0_i32, %c0_i32_0 : i32, i32
  }
  func.func @transform_4(%arg0: i32, %arg1: i32) -> (i32, i32) {
    %c0_i32 = arith.constant 0 : i32
    %c0_i32_0 = arith.constant 0 : i32
    %c0_i32_1 = arith.constant 0 : i32
    return %c0_i32, %c0_i32_0 : i32, i32
  }
  func.func @transform_5(%arg0: i32, %arg1: i32) -> (i32, i32) {
    %c0_i32 = arith.constant 0 : i32
    %c0_i32_0 = arith.constant 0 : i32
    %c0_i32_1 = arith.constant 0 : i32
    return %c0_i32, %c0_i32_0 : i32, i32
  }
  func.func @transform_6(%arg0: i32, %arg1: i32) -> (i32, i32) {
    %c0_i32 = arith.constant 0 : i32
    %c0_i32_0 = arith.constant 0 : i32
    %c0_i32_1 = arith.constant 0 : i32
    return %c0_i32, %c0_i32_0 : i32, i32
  }
  func.func @transform_7(%arg0: i32, %arg1: i32) -> (i32, i32, i32) {
    %c0_i32 = arith.constant 0 : i32
    %c0_i32_0 = arith.constant 0 : i32
    return %arg0, %arg1, %c0_i32 : i32, i32, i32
  }
}

</mosaic_0001>

<llo_original>
// kernel: tpu_custom_call.1
$region0: #{tpu_custom_call.1}
  #allocation0 [shape = 'u32[]', space=smem, size = 0x4, offset = 0x4, fixed_abs, tag = 'smem constant byte address 0x4 - core index']
  #allocation1 [shape = 'u32[144,128]{1,0:T(1,128)}', space=vmem, size = 0x12000, scoped, tag = 'internal scratch']
  #allocation2 [shape = 'bf16[1,128,128]{2,1,0:T(8,128)(2,1)}', space=vmem, size = 0x8000, scoped, tag = 'scratch operand']
  %s0 = inlined_call_operand.hbm [shape: bf16[2,8,128], index: 0, kind: input, shape index: {}]
  %s1 = inlined_call_operand.hbm [shape: bf16[2,128,128], index: 1, kind: input, shape index: {}]
  %s2 = inlined_call_operand.hbm [shape: bf16[128,128], index: 2, kind: input, shape index: {}]
  %s3 = inlined_call_operand.vmem [shape: f32[1,128], index: 3, kind: input, shape index: {}]
  %s4 = inlined_call_operand.hbm [shape: bf16[128,128], index: 4, kind: input, shape index: {}]
  %s5 = inlined_call_operand.hbm [shape: bf16[128,128], index: 5, kind: input, shape index: {}]
  %s6 = inlined_call_operand.vmem [shape: f32[1,128], index: 6, kind: input, shape index: {}]
  %s7 = inlined_call_operand.hbm [shape: f32[2,8,128], index: 7, kind: output, shape index: {}]
  %s8 = sld [smem:[#allocation0]]
  $region85: #{tpu_custom_call.1} parent=0
    _
  %s10 = ssub.s32 1, %s8
  %s11 = scalar_select 0, %s10, %s8
  $region1: #{tpu_custom_call.1} parent=0
    #allocation3 [shape = 'u8[4096]{0}', space=vmem, size = 0x1000, scoped, tag = 'input window, operand 0']
    #allocation4 [shape = 's32[2]{0}', space=sflag, size = 0x8, scoped, tag = 'scoped memory for tpu_custom_call.1']
    #allocation5 [shape = 's32[2]{0}', space=sflag, size = 0x8, scoped, tag = 'scoped memory for tpu_custom_call.1']
    #allocation6 [shape = 'u8[65536]{0}', space=vmem, size = 0x10000, scoped, tag = 'input window, operand 1']
    #allocation7 [shape = 's32[2]{0}', space=sflag, size = 0x8, scoped, tag = 'scoped memory for tpu_custom_call.1']
    #allocation8 [shape = 'u8[32768]{0}', space=vmem, size = 0x8000, scoped, tag = 'input window, operand 2, single buffered']
    #allocation9 [shape = 'u8[32768]{0}', space=vmem, size = 0x8000, scoped, tag = 'input window, operand 4, single buffered']
    #allocation10 [shape = 's32[1]{0}', space=sflag, size = 0x4, scoped, tag = 'scoped memory for tpu_custom_call.1']
    #allocation11 [shape = 'u8[32768]{0}', space=vmem, size = 0x8000, scoped, tag = 'input window, operand 5, single buffered']
    #allocation12 [shape = 'u8[8192]{0}', space=vmem, size = 0x2000, scoped, tag = 'output window, operand 0']
    %12 = vsyncpa [#allocation4], 0
    %s13 = scalar_lea.sflag [#allocation4], 1
    %14 = vsyncpa %s13, 0
    %15 = vsyncpa [#allocation7], 0
    %s16 = scalar_lea.sflag [#allocation7], 1
    %17 = vsyncpa %s16, 0
    %18 = vsyncpa [#allocation10], 0
    %19 = vsyncpa [#allocation5], 0
    %s20 = scalar_lea.sflag [#allocation5], 1
    %21 = vsyncpa %s20, 0
    loop: start=0, step=1, limit=4
    $region2: #{tpu_custom_call.1} parent=1 // loop_pre_header
      _
    $region3: #{tpu_custom_call.1} parent=1 // loop_header
      %s23 = sphi 0, %s27
      %p24 = scmp.ge.s32.totalorder %s23, 4
      %s30 = sphi 0, %s42
      %s31 = sphi 0, %s38
      %s32 = sphi 0, %s30
      %s33 = sphi 0, %s31
      %s34 = sphi 0, %s32
      %s35 = sphi 0, %s33
      %s47 = sphi 0, %s49
      %s50 = sphi 0, %s47
      %s51 = sphi 0, %s50
      %s67 = sphi 0, %s51
      %s73 = sphi 0, %s75
      %s76 = sphi 0, %s73
      %s77 = sphi 0, %s76
      %s93 = sphi 0, %s77
      %s97 = sphi 0, %s97
      %s99 = sphi 0, %s97
      %s100 = sphi 0, %s99
      %s114 = sphi 0, %s100
      %s118 = sphi 0, %s118
      %s120 = sphi 0, %s118
      %s121 = sphi 0, %s120
      %s135 = sphi 0, %s121
      %s139 = sphi 0, %s139
      %s141 = sphi 0, %s139
      %s142 = sphi 0, %s141
      %s156 = sphi 0, %s142
      %s160 = sphi 0, %s160
      %s162 = sphi 0, %s160
      %s163 = sphi 0, %s162
      %s177 = sphi 0, %s163
      %s181 = sphi 0, %s181
      %s183 = sphi 0, %s181
      %s184 = sphi 0, %s183
      %s198 = sphi 0, %s184
      %s206 = sphi 0, %s208
      %s209 = sphi 0, %s206
      %s210 = sphi 0, %s209
      %s226 = sphi 0, %s210
    $region4: #{tpu_custom_call.1} parent=1 // loop_header_branch
      %26 = sbr.rel (%p24) target = $region8
    $region5: #{tpu_custom_call.1} parent=1 // loop_body
      %s28 = ssub.s32 %s23, 1
      %s29 = ssub.s32 %s23, 2
      %s36 = sadd.s32 1, %s31
      %p37 = scmp.ge.s32.totalorder %s36, 1
      %s38 = scalar_select %p37, 0, %s36
      %s39 = sadd.s32 1, %s30
      %s40 = scalar_select %p37, %s39, %s30
      %p41 = scmp.ge.s32.totalorder %s40, 2
      %s42 = scalar_select %p41, 0, %s40
      %s43 = ssub.s32 %s30, %s42
      %s44 = ssub.s32 %s31, %s38
      %s45 = sor.u32 %s43, %s44
      %p46 = scmp.eq.s32.totalorder %s45, 0
      %s48 = sadd.s32 %s47, 1
      %s49 = scalar_select %p46, %s47, %s48
      %p52 = pneg %p46
      %p53 = scmp.eq.s32.totalorder %s23, 1
      %p54 = por %p52, %p53
      %p55 = scmp.ne.s32.totalorder %s47, %s50
      %p56 = scmp.eq.s32.totalorder %s23, 0
      %p57 = por %p55, %p56
      %p58 = scmp.ne.s32.totalorder %s47, %s50
      %p59 = scmp.eq.s32.totalorder %s28, 1
      %p60 = por %p58, %p59
      %p61 = scmp.ne.s32.totalorder %s50, %s51
      %p62 = scmp.eq.s32.totalorder %s28, 0
      %p63 = por %p61, %p62
      %p64 = scmp.ne.s32.totalorder %s50, %s51
      %p65 = scmp.eq.s32.totalorder %s29, 1
      %p66 = por %p64, %p65
      %p68 = scmp.ne.s32.totalorder %s51, %s67
      %p69 = scmp.eq.s32.totalorder %s29, 0
      %p70 = por %p68, %p69
      %s71 = ssub.s32 %s30, %s42
      %p72 = scmp.eq.s32.totalorder %s71, 0
      %s74 = sadd.s32 %s73, 1
      %s75 = scalar_select %p72, %s73, %s74
      %p78 = pneg %p72
      %p79 = scmp.eq.s32.totalorder %s23, 1
      %p80 = por %p78, %p79
      %p81 = scmp.ne.s32.totalorder %s73, %s76
      %p82 = scmp.eq.s32.totalorder %s23, 0
      %p83 = por %p81, %p82
      %p84 = scmp.ne.s32.totalorder %s73, %s76
      %p85 = scmp.eq.s32.totalorder %s28, 1
      %p86 = por %p84, %p85
      %p87 = scmp.ne.s32.totalorder %s76, %s77
      %p88 = scmp.eq.s32.totalorder %s28, 0
      %p89 = por %p87, %p88
      %p90 = scmp.ne.s32.totalorder %s76, %s77
      %p91 = scmp.eq.s32.totalorder %s29, 1
      %p92 = por %p90, %p91
      %p94 = scmp.ne.s32.totalorder %s77, %s93
      %p95 = scmp.eq.s32.totalorder %s29, 0
      %p96 = por %p94, %p95
      %s98 = sadd.s32 %s97, 1
      %p101 = scmp.eq.s32.totalorder %s23, 1
      %p102 = scmp.ne.s32.totalorder %s97, %s99
      %p103 = scmp.eq.s32.totalorder %s23, 0
      %p104 = por %p102, %p103
      %p105 = scmp.ne.s32.totalorder %s97, %s99
      %p106 = scmp.eq.s32.totalorder %s28, 1
      %p107 = por %p105, %p106
      %p108 = scmp.ne.s32.totalorder %s99, %s100
      %p109 = scmp.eq.s32.totalorder %s28, 0
      %p110 = por %p108, %p109
      %p111 = scmp.ne.s32.totalorder %s99, %s100
      %p112 = scmp.eq.s32.totalorder %s29, 1
      %p113 = por %p111, %p112
      %p115 = scmp.ne.s32.totalorder %s100, %s114
      %p116 = scmp.eq.s32.totalorder %s29, 0
      %p117 = por %p115, %p116
      %s119 = sadd.s32 %s118, 1
      %p122 = scmp.eq.s32.totalorder %s23, 1
      %p123 = scmp.ne.s32.totalorder %s118, %s120
      %p124 = scmp.eq.s32.totalorder %s23, 0
      %p125 = por %p123, %p124
      %p126 = scmp.ne.s32.totalorder %s118, %s120
      %p127 = scmp.eq.s32.totalorder %s28, 1
      %p128 = por %p126, %p127
      %p129 = scmp.ne.s32.totalorder %s120, %s121
      %p130 = scmp.eq.s32.totalorder %s28, 0
      %p131 = por %p129, %p130
      %p132 = scmp.ne.s32.totalorder %s120, %s121
      %p133 = scmp.eq.s32.totalorder %s29, 1
      %p134 = por %p132, %p133
      %p136 = scmp.ne.s32.totalorder %s121, %s135
      %p137 = scmp.eq.s32.totalorder %s29, 0
      %p138 = por %p136, %p137
      %s140 = sadd.s32 %s139, 1
      %p143 = scmp.eq.s32.totalorder %s23, 1
      %p144 = scmp.ne.s32.totalorder %s139, %s141
      %p145 = scmp.eq.s32.totalorder %s23, 0
      %p146 = por %p144, %p145
      %p147 = scmp.ne.s32.totalorder %s139, %s141
      %p148 = scmp.eq.s32.totalorder %s28, 1
      %p149 = por %p147, %p148
      %p150 = scmp.ne.s32.totalorder %s141, %s142
      %p151 = scmp.eq.s32.totalorder %s28, 0
      %p152 = por %p150, %p151
      %p153 = scmp.ne.s32.totalorder %s141, %s142
      %p154 = scmp.eq.s32.totalorder %s29, 1
      %p155 = por %p153, %p154
      %p157 = scmp.ne.s32.totalorder %s142, %s156
      %p158 = scmp.eq.s32.totalorder %s29, 0
      %p159 = por %p157, %p158
      %s161 = sadd.s32 %s160, 1
      %p164 = scmp.eq.s32.totalorder %s23, 1
      %p165 = scmp.ne.s32.totalorder %s160, %s162
      %p166 = scmp.eq.s32.totalorder %s23, 0
      %p167 = por %p165, %p166
      %p168 = scmp.ne.s32.totalorder %s160, %s162
      %p169 = scmp.eq.s32.totalorder %s28, 1
      %p170 = por %p168, %p169
      %p171 = scmp.ne.s32.totalorder %s162, %s163
      %p172 = scmp.eq.s32.totalorder %s28, 0
      %p173 = por %p171, %p172
      %p174 = scmp.ne.s32.totalorder %s162, %s163
      %p175 = scmp.eq.s32.totalorder %s29, 1
      %p176 = por %p174, %p175
      %p178 = scmp.ne.s32.totalorder %s163, %s177
      %p179 = scmp.eq.s32.totalorder %s29, 0
      %p180 = por %p178, %p179
      %s182 = sadd.s32 %s181, 1
      %p185 = scmp.eq.s32.totalorder %s23, 1
      %p186 = scmp.ne.s32.totalorder %s181, %s183
      %p187 = scmp.eq.s32.totalorder %s23, 0
      %p188 = por %p186, %p187
      %p189 = scmp.ne.s32.totalorder %s181, %s183
      %p190 = scmp.eq.s32.totalorder %s28, 1
      %p191 = por %p189, %p190
      %p192 = scmp.ne.s32.totalorder %s183, %s184
      %p193 = scmp.eq.s32.totalorder %s28, 0
      %p194 = por %p192, %p193
      %p195 = scmp.ne.s32.totalorder %s183, %s184
      %p196 = scmp.eq.s32.totalorder %s29, 1
      %p197 = por %p195, %p196
      %p199 = scmp.ne.s32.totalorder %s184, %s198
      %p200 = scmp.eq.s32.totalorder %s29, 0
      %p201 = por %p199, %p200
      %s202 = ssub.s32 %s30, %s42
      %s203 = ssub.s32 %s31, %s38
      %s204 = sor.u32 %s202, %s203
      %p205 = scmp.eq.s32.totalorder %s204, 0
      %s207 = sadd.s32 %s206, 1
      %s208 = scalar_select %p205, %s206, %s207
      %p211 = pneg %p205
      %p212 = scmp.eq.s32.totalorder %s23, 1
      %p213 = por %p211, %p212
      %p214 = scmp.ne.s32.totalorder %s206, %s209
      %p215 = scmp.eq.s32.totalorder %s23, 0
      %p216 = por %p214, %p215
      %p217 = scmp.ne.s32.totalorder %s206, %s209
      %p218 = scmp.eq.s32.totalorder %s28, 1
      %p219 = por %p217, %p218
      %p220 = scmp.ne.s32.totalorder %s209, %s210
      %p221 = scmp.eq.s32.totalorder %s28, 0
      %p222 = por %p220, %p221
      %p223 = scmp.ne.s32.totalorder %s209, %s210
      %p224 = scmp.eq.s32.totalorder %s29, 1
      %p225 = por %p223, %p224
      %p227 = scmp.ne.s32.totalorder %s210, %s226
      %p228 = scmp.eq.s32.totalorder %s29, 0
      %p229 = por %p227, %p228
      %p230 = scmp.le.s32.totalorder 1, %s23
      %p231 = scmp.lt.s32.totalorder %s23, 3
      %p232 = pnand %p230, %p231
      %p233 = pneg %p232
      // Predicated region
      $region9: #{tpu_custom_call.1} parent=5 // pred_check
        _
      $region10: #{tpu_custom_call.1} parent=5 // pred_check_branch
        %235 = sbr.rel (%p232) target = $region12
      $region11: #{tpu_custom_call.1} parent=5 // pred_region
        %s236 = ssub.s32 %s23, 1
        // Predicated region
        $region13: #{tpu_custom_call.1} parent=11 // pred_check
          %p237 = pneg %p110
        $region14: #{tpu_custom_call.1} parent=11 // pred_check_branch
          %239 = sbr.rel (%p237) target = $region16
        $region15: #{tpu_custom_call.1} parent=11 // pred_region
          %s241 = ssub.s32 1024, 1024
          %242 = vsyncadd [#allocation7], %s241
          %s243 = sshll.u32 [#allocation8], 4
          %s244 = int_to_ptr.vmem [resolvable:$true] %s243
          %249 = dma.hbm_to_vmem [thread:$0]  %s2, 1024, %s244, [#allocation7], 64, 64, 4
        $region16: #{tpu_custom_call.1} parent=11 // pred_fallthru
          _
        // Predicated region
        $region17: #{tpu_custom_call.1} parent=11 // pred_check
          %p250 = pneg %p131
        $region18: #{tpu_custom_call.1} parent=11 // pred_check_branch
          %252 = sbr.rel (%p250) target = $region20
        $region19: #{tpu_custom_call.1} parent=11 // pred_region
          _
        $region20: #{tpu_custom_call.1} parent=11 // pred_fallthru
          _
        // Predicated region
        $region21: #{tpu_custom_call.1} parent=11 // pred_check
          %p253 = pneg %p152
        $region22: #{tpu_custom_call.1} parent=11 // pred_check_branch
          %255 = sbr.rel (%p253) target = $region24
        $region23: #{tpu_custom_call.1} parent=11 // pred_region
          %s257 = ssub.s32 1024, 1024
          %258 = vsyncadd [#allocation10], %s257
          %s259 = sshll.u32 [#allocation9], 4
          %s260 = int_to_ptr.vmem [resolvable:$true] %s259
          %265 = dma.hbm_to_vmem [thread:$0]  %s4, 1024, %s260, [#allocation10], 64, 64, 4
        $region24: #{tpu_custom_call.1} parent=11 // pred_fallthru
          _
        // Predicated region
        $region25: #{tpu_custom_call.1} parent=11 // pred_check
          %p266 = pneg %p173
        $region26: #{tpu_custom_call.1} parent=11 // pred_check_branch
          %268 = sbr.rel (%p266) target = $region28
        $region27: #{tpu_custom_call.1} parent=11 // pred_region
          %s270 = ssub.s32 1024, 1024
          %271 = vsyncadd [#allocation10], %s270
          %s272 = sshll.u32 [#allocation11], 4
          %s273 = int_to_ptr.vmem [resolvable:$true] %s272
          %278 = dma.hbm_to_vmem [thread:$0]  %s5, 1024, %s273, [#allocation10], 64, 64, 4
        $region28: #{tpu_custom_call.1} parent=11 // pred_fallthru
          _
        // Predicated region
        $region29: #{tpu_custom_call.1} parent=11 // pred_check
          %p279 = pneg %p194
        $region30: #{tpu_custom_call.1} parent=11 // pred_check_branch
          %281 = sbr.rel (%p279) target = $region32
        $region31: #{tpu_custom_call.1} parent=11 // pred_region
          _
        $region32: #{tpu_custom_call.1} parent=11 // pred_fallthru
          _
      $region12: #{tpu_custom_call.1} parent=5 // pred_fallthru
        _
      %p282 = scmp.lt.s32.totalorder %s23, 2
      // Predicated region
      $region33: #{tpu_custom_call.1} parent=5 // pred_check
        %p283 = pneg %p282
      $region34: #{tpu_custom_call.1} parent=5 // pred_check_branch
        %285 = sbr.rel (%p283) target = $region36
      $region35: #{tpu_custom_call.1} parent=5 // pred_region
        // Predicated region
        $region37: #{tpu_custom_call.1} parent=35 // pred_check
          %p286 = pneg %p57
        $region38: #{tpu_custom_call.1} parent=35 // pred_check_branch
          %288 = sbr.rel (%p286) target = $region40
        $region39: #{tpu_custom_call.1} parent=35 // pred_region
          %s289 = sand.u32 %s47, 1
          %s290 = scalar_lea.sflag [#allocation4], %s289
          %s291 = sand.u32 %s47, 1
          %s292 = smul.addr %s291, 4
          %s293 = scalar_lea.vmem [#allocation3], %s292
          %s295 = ssub.s32 64, 64
          %296 = vsyncadd %s290, %s295
          %s297 = sadd.s32 %s31, %s30
          %s298 = smul.addr %s297, 64
          %s299 = scalar_lea.hbm %s0, %s298
          %s301 = sshll.u32 %s293, 4
          %s302 = int_to_ptr.vmem [resolvable:$true] %s301
          %304 = dma.hbm_to_vmem [thread:$0]  %s299, 64, %s302, %s290
        $region40: #{tpu_custom_call.1} parent=35 // pred_fallthru
          _
        // Predicated region
        $region41: #{tpu_custom_call.1} parent=35 // pred_check
          %p305 = pneg %p83
        $region42: #{tpu_custom_call.1} parent=35 // pred_check_branch
          %307 = sbr.rel (%p305) target = $region44
        $region43: #{tpu_custom_call.1} parent=35 // pred_region
          %s308 = sand.u32 %s23, 1
          %s309 = scalar_lea.sflag [#allocation7], %s308
          %s310 = sand.u32 %s73, 1
          %s311 = smul.addr %s310, 64
          %s312 = scalar_lea.vmem [#allocation6], %s311
          %s314 = ssub.s32 1024, 1024
          %315 = vsyncadd %s309, %s314
          %s316 = smul.addr %s30, 16
          %s317 = smul.addr %s316, 64
          %s318 = scalar_lea.hbm %s1, %s317
          %s319 = sshll.u32 %s312, 4
          %s320 = int_to_ptr.vmem [resolvable:$true] %s319
          %325 = dma.hbm_to_vmem [thread:$0]  %s318, 1024, %s320, %s309, 64, 64, 4
        $region44: #{tpu_custom_call.1} parent=35 // pred_fallthru
          _
      $region36: #{tpu_custom_call.1} parent=5 // pred_fallthru
        _
      %p326 = scmp.le.s32.totalorder 1, %s23
      %p327 = scmp.lt.s32.totalorder %s23, 3
      %p328 = pnand %p326, %p327
      %p329 = pneg %p328
      // Predicated region
      $region45: #{tpu_custom_call.1} parent=5 // pred_check
        _
      $region46: #{tpu_custom_call.1} parent=5 // pred_check_branch
        %331 = sbr.rel (%p328) target = $region48
      $region47: #{tpu_custom_call.1} parent=5 // pred_region
        %s332 = ssub.s32 %s23, 1
        %s333 = sand.u32 %s50, 1
        %s334 = scalar_lea.sflag [#allocation4], %s333
        %s335 = sand.u32 %s50, 1
        %s336 = smul.addr %s335, 4
        %s337 = scalar_lea.vmem [#allocation3], %s336
        // Predicated region
        $region49: #{tpu_custom_call.1} parent=47 // pred_check
          %p338 = pneg %p63
        $region50: #{tpu_custom_call.1} parent=47 // pred_check_branch
          %340 = sbr.rel (%p338) target = $region52
        $region51: #{tpu_custom_call.1} parent=47 // pred_region
          %341 = dma.done %s334, 64
        $region52: #{tpu_custom_call.1} parent=47 // pred_fallthru
          _
        %s342 = sand.u32 %s28, 1
        %s343 = scalar_lea.sflag [#allocation7], %s342
        %s344 = sand.u32 %s76, 1
        %s345 = smul.addr %s344, 64
        %s346 = scalar_lea.vmem [#allocation6], %s345
        // Predicated region
        $region53: #{tpu_custom_call.1} parent=47 // pred_check
          %p347 = pneg %p89
        $region54: #{tpu_custom_call.1} parent=47 // pred_check_branch
          %349 = sbr.rel (%p347) target = $region56
        $region55: #{tpu_custom_call.1} parent=47 // pred_region
          %350 = dma.done %s343, 1024
        $region56: #{tpu_custom_call.1} parent=47 // pred_fallthru
          _
        // Predicated region
        $region57: #{tpu_custom_call.1} parent=47 // pred_check
          %p351 = pneg %p110
        $region58: #{tpu_custom_call.1} parent=47 // pred_check_branch
          %353 = sbr.rel (%p351) target = $region60
        $region59: #{tpu_custom_call.1} parent=47 // pred_region
          %354 = dma.done [#allocation7], 1024
        $region60: #{tpu_custom_call.1} parent=47 // pred_fallthru
          _
        // Predicated region
        $region61: #{tpu_custom_call.1} parent=47 // pred_check
          %p355 = pneg %p152
        $region62: #{tpu_custom_call.1} parent=47 // pred_check_branch
          %357 = sbr.rel (%p355) target = $region64
        $region63: #{tpu_custom_call.1} parent=47 // pred_region
          %358 = dma.done [#allocation10], 1024
        $region64: #{tpu_custom_call.1} parent=47 // pred_fallthru
          _
        // Predicated region
        $region65: #{tpu_custom_call.1} parent=47 // pred_check
          %p359 = pneg %p173
        $region66: #{tpu_custom_call.1} parent=47 // pred_check_branch
          %361 = sbr.rel (%p359) target = $region68
        $region67: #{tpu_custom_call.1} parent=47 // pred_region
          %362 = dma.done [#allocation10], 1024
        $region68: #{tpu_custom_call.1} parent=47 // pred_fallthru
          _
        %s363 = sand.u32 %s50, 1
        %s364 = scalar_lea.sflag [#allocation4], %s363
        %s365 = sand.u32 %s50, 1
        %s366 = smul.addr %s365, 4
        %s367 = scalar_lea.vmem [#allocation3], %s366
        %p368 = pneg %p63
        %p369 = pneg %p60
        %s370 = sand.u32 %s28, 1
        %s371 = scalar_lea.sflag [#allocation7], %s370
        %s372 = sand.u32 %s76, 1
        %s373 = smul.addr %s372, 64
        %s374 = scalar_lea.vmem [#allocation6], %s373
        %p375 = pneg %p89
        %p376 = pneg %p86
        %p377 = pneg %p110
        %p378 = pneg %p107
        %p379 = pneg %p131
        %p380 = pneg %p128
        %p381 = pneg %p152
        %p382 = pneg %p149
        %p383 = pneg %p173
        %p384 = pneg %p170
        %p385 = pneg %p194
        %p386 = pneg %p191
        %p387 = pneg %p222
        %p388 = pneg %p219
        %s389 = sand.u32 %s209, 1
        %s390 = scalar_lea.sflag [#allocation5], %s389
        %s391 = sand.u32 %s209, 1
        %s392 = smul.addr %s391, 8
        %s393 = scalar_lea.vmem [#allocation12], %s392
        %p395 = scmp.eq.s32.totalorder %s33, 0
        // Predicated region
        $region69: #{tpu_custom_call.1} parent=47 // pred_check
          %p396 = pneg %p395
        $region70: #{tpu_custom_call.1} parent=47 // pred_check_branch
          %398 = sbr.rel (%p396) target = $region72
        $region71: #{tpu_custom_call.1} parent=47 // pred_region
          %v399 = vld [vmem:[%s346] sm:$0xf]
          %v400 = vld [vmem:[%s346 + $0x4] sm:$0xf]
          %v401 = vld [vmem:[%s346 + $0x8] sm:$0xf]
          %v402 = vld [vmem:[%s346 + $0xc] sm:$0xf]
          %v403 = vld [vmem:[%s346 + $0x10] sm:$0xf]
          %v404 = vld [vmem:[%s346 + $0x14] sm:$0xf]
          %v405 = vld [vmem:[%s346 + $0x18] sm:$0xf]
          %v406 = vld [vmem:[%s346 + $0x1c] sm:$0xf]
          %v407 = vld [vmem:[%s346 + $0x20] sm:$0xf]
          %v408 = vld [vmem:[%s346 + $0x24] sm:$0xf]
          %v409 = vld [vmem:[%s346 + $0x28] sm:$0xf]
          %v410 = vld [vmem:[%s346 + $0x2c] sm:$0xf]
          %v411 = vld [vmem:[%s346 + $0x30] sm:$0xf]
          %v412 = vld [vmem:[%s346 + $0x34] sm:$0xf]
          %v413 = vld [vmem:[%s346 + $0x38] sm:$0xf]
          %v414 = vld [vmem:[%s346 + $0x3c] sm:$0xf]
          %v415 = vld [vmem:[#allocation8] sm:$0xf]
          %v416 = vld [vmem:[#allocation8 + $0x4] sm:$0xf]
          %v417 = vld [vmem:[#allocation8 + $0x8] sm:$0xf]
          %v418 = vld [vmem:[#allocation8 + $0xc] sm:$0xf]
          %v419 = vld [vmem:[#allocation8 + $0x10] sm:$0xf]
          %v420 = vld [vmem:[#allocation8 + $0x14] sm:$0xf]
          %v421 = vld [vmem:[#allocation8 + $0x18] sm:$0xf]
          %v422 = vld [vmem:[#allocation8 + $0x1c] sm:$0xf]
          %v423 = vld [vmem:[#allocation8 + $0x20] sm:$0xf]
          %v424 = vld [vmem:[#allocation8 + $0x24] sm:$0xf]
          %v425 = vld [vmem:[#allocation8 + $0x28] sm:$0xf]
          %v426 = vld [vmem:[#allocation8 + $0x2c] sm:$0xf]
          %v427 = vld [vmem:[#allocation8 + $0x30] sm:$0xf]
          %v428 = vld [vmem:[#allocation8 + $0x34] sm:$0xf]
          %v429 = vld [vmem:[#allocation8 + $0x38] sm:$0xf]
          %v430 = vld [vmem:[#allocation8 + $0x3c] sm:$0xf]
          %v431 = vld [vmem:[%s3] sm:$0x1]
          %v433 = vlaneseq
          %v434 = vshrl.u32 %v433, 7
          %v435 = vsub.s32 0, %v434
          %v436 = vrot.slane %v431, %v435
          %v454 = vunpack.c.l.b16 %v399
          %v455 = vunpack.c.l.b16 %v400
          %v456 = vunpack.c.l.b16 %v401
          %v457 = vunpack.c.l.b16 %v402
          %v458 = vunpack.c.l.b16 %v403
          %v459 = vunpack.c.l.b16 %v404
          %v460 = vunpack.c.l.b16 %v405
          %v461 = vunpack.c.l.b16 %v406
          %v462 = vunpack.c.l.b16 %v407
          %v463 = vunpack.c.l.b16 %v408
          %v464 = vunpack.c.l.b16 %v409
          %v465 = vunpack.c.l.b16 %v410
          %v466 = vunpack.c.l.b16 %v411
          %v467 = vunpack.c.l.b16 %v412
          %v468 = vunpack.c.l.b16 %v413
          %v469 = vunpack.c.l.b16 %v414
          %v470 = vpack.c.b16 %v455, %v454
          %v471 = vpack.c.b16 %v457, %v456
          %v472 = vpack.c.b16 %v459, %v458
          %v473 = vpack.c.b16 %v461, %v460
          %v474 = vpack.c.b16 %v463, %v462
          %v475 = vpack.c.b16 %v465, %v464
          %v476 = vpack.c.b16 %v467, %v466
          %v477 = vpack.c.b16 %v469, %v468
          %v502 = vunpack.c.l.b16 %v415
          %v503 = vunpack.c.l.b16 %v416
          %v504 = vunpack.c.l.b16 %v417
          %v505 = vunpack.c.l.b16 %v418
          %v506 = vunpack.c.l.b16 %v419
          %v507 = vunpack.c.l.b16 %v420
          %v508 = vunpack.c.l.b16 %v421
          %v509 = vunpack.c.l.b16 %v422
          %v510 = vunpack.c.l.b16 %v423
          %v511 = vunpack.c.l.b16 %v424
          %v512 = vunpack.c.l.b16 %v425
          %v513 = vunpack.c.l.b16 %v426
          %v514 = vunpack.c.l.b16 %v427
          %v515 = vunpack.c.l.b16 %v428
          %v516 = vunpack.c.l.b16 %v429
          %v517 = vunpack.c.l.b16 %v430
          %v518 = vpack.c.b16 %v503, %v502
          %v519 = vpack.c.b16 %v505, %v504
          %v520 = vpack.c.b16 %v507, %v506
          %v521 = vpack.c.b16 %v509, %v508
          %v522 = vpack.c.b16 %v511, %v510
          %v523 = vpack.c.b16 %v513, %v512
          %v524 = vpack.c.b16 %v515, %v514
          %v525 = vpack.c.b16 %v517, %v516
          %534 = vmatprep.subr.bf16.mxu0 0
          %535 = vmatpush1.bf16.msra.mxu0 %v525
          %536 = vmatprep.subr.bf16.mxu0 0
          %537 = vmatpush1.bf16.msra.mxu0 %v524
          %538 = vmatprep.subr.bf16.mxu0 0
          %539 = vmatpush1.bf16.msra.mxu0 %v523
          %540 = vmatprep.subr.bf16.mxu0 0
          %541 = vmatpush1.bf16.msra.mxu0 %v522
          %542 = vmatprep.subr.bf16.mxu0 0
          %543 = vmatpush1.bf16.msra.mxu0 %v521
          %544 = vmatprep.subr.bf16.mxu0 0
          %545 = vmatpush1.bf16.msra.mxu0 %v520
          %546 = vmatprep.subr.bf16.mxu0 0
          %547 = vmatpush1.bf16.msra.mxu0 %v519
          %548 = vmatprep.subr.bf16.mxu0 0
          %549 = vmatpush1.bf16.msra.mxu0 %v518
          %550 = vmatprep.subr.bf16.mxu0 0
          %551 = vmatpush2.bf16.msra.mxu0 0
          %552 = vmatprep.subr.bf16.mxu0 0
          %553 = vmatpush2.bf16.msra.mxu0 0
          %554 = vmatprep.subr.bf16.mxu0 0
          %555 = vmatpush2.bf16.msra.mxu0 0
          %556 = vmatprep.subr.bf16.mxu0 0
          %557 = vmatpush2.bf16.msra.mxu0 0
          %558 = vmatprep.subr.bf16.mxu0 0
          %559 = vmatpush2.bf16.msra.mxu0 0
          %560 = vmatprep.subr.bf16.mxu0 0
          %561 = vmatpush2.bf16.msra.mxu0 0
          %562 = vmatprep.subr.bf16.mxu0 0
          %563 = vmatpush2.bf16.msra.mxu0 0
          %564 = vmatprep.subr.bf16.mxu0 0
          %565 = vmatpush2.bf16.msra.mxu0 0
          %566 = vmatprep.mubr.bf16.mxu0 0
          %567 = vmatmul.mubr.bf16.gmra.mxu0 %v470
          %v568 = vpop.f32.mrf.mxu0
          %v569 = vadd.f32 %v436, %v568
          %v570 = vpop.f32.mrf.mxu0
          %v571 = vpop.f32.mrf.mxu0
          %v572 = vadd.f32 %v436, %v571
          %v573 = vpop.f32.mrf.mxu0
          %574 = vmatprep.mubr.bf16.mxu0 0
          %575 = vmatmul.mubr.bf16.gmra.mxu0 %v471
          %v576 = vpop.f32.mrf.mxu0
          %v577 = vadd.f32 %v436, %v576
          %v578 = vpop.f32.mrf.mxu0
          %v579 = vpop.f32.mrf.mxu0
          %v580 = vadd.f32 %v436, %v579
          %v581 = vpop.f32.mrf.mxu0
          %582 = vmatprep.mubr.bf16.mxu0 0
          %583 = vmatmul.mubr.bf16.gmra.mxu0 %v472
          %v584 = vpop.f32.mrf.mxu0
          %v585 = vadd.f32 %v436, %v584
          %v586 = vpop.f32.mrf.mxu0
          %v587 = vpop.f32.mrf.mxu0
          %v588 = vadd.f32 %v436, %v587
          %v589 = vpop.f32.mrf.mxu0
          %590 = vmatprep.mubr.bf16.mxu0 0
          %591 = vmatmul.mubr.bf16.gmra.mxu0 %v473
          %v592 = vpop.f32.mrf.mxu0
          %v593 = vadd.f32 %v436, %v592
          %v594 = vpop.f32.mrf.mxu0
          %v595 = vpop.f32.mrf.mxu0
          %v596 = vadd.f32 %v436, %v595
          %v597 = vpop.f32.mrf.mxu0
          %598 = vmatprep.mubr.bf16.mxu0 0
          %599 = vmatmul.mubr.bf16.gmra.mxu0 %v474
          %v600 = vpop.f32.mrf.mxu0
          %v601 = vadd.f32 %v436, %v600
          %v602 = vpop.f32.mrf.mxu0
          %v603 = vpop.f32.mrf.mxu0
          %v604 = vadd.f32 %v436, %v603
          %v605 = vpop.f32.mrf.mxu0
          %606 = vmatprep.mubr.bf16.mxu0 0
          %607 = vmatmul.mubr.bf16.gmra.mxu0 %v475
          %v608 = vpop.f32.mrf.mxu0
          %v609 = vadd.f32 %v436, %v608
          %v610 = vpop.f32.mrf.mxu0
          %v611 = vpop.f32.mrf.mxu0
          %v612 = vadd.f32 %v436, %v611
          %v613 = vpop.f32.mrf.mxu0
          %614 = vmatprep.mubr.bf16.mxu0 0
          %615 = vmatmul.mubr.bf16.gmra.mxu0 %v476
          %v616 = vpop.f32.mrf.mxu0
          %v617 = vadd.f32 %v436, %v616
          %v618 = vpop.f32.mrf.mxu0
          %v619 = vpop.f32.mrf.mxu0
          %v620 = vadd.f32 %v436, %v619
          %v621 = vpop.f32.mrf.mxu0
          %622 = vmatprep.mubr.bf16.mxu0 0
          %623 = vmatmul.mubr.bf16.gmra.mxu0 %v477
          %v624 = vpop.f32.mrf.mxu0
          %v625 = vadd.f32 %v436, %v624
          %v626 = vpop.f32.mrf.mxu0
          %v627 = vpop.f32.mrf.mxu0
          %v628 = vadd.f32 %v436, %v627
          %v629 = vpop.f32.mrf.mxu0
          %630 = vdwg.mxu0
          %v631 = vpack.c.bf16 %v572, %v569
          %v632 = vpack.c.bf16 %v580, %v577
          %v633 = vpack.c.bf16 %v588, %v585
          %v634 = vpack.c.bf16 %v596, %v593
          %v635 = vpack.c.bf16 %v604, %v601
          %v636 = vpack.c.bf16 %v612, %v609
          %v637 = vpack.c.bf16 %v620, %v617
          %v638 = vpack.c.bf16 %v628, %v625
          %v647 = vunpack.c.l.b16 %v631
          %v648 = vunpack.c.h.b16 %v631
          %v649 = vunpack.c.l.b16 %v632
          %v650 = vunpack.c.h.b16 %v632
          %v651 = vunpack.c.l.b16 %v633
          %v652 = vunpack.c.h.b16 %v633
          %v653 = vunpack.c.l.b16 %v634
          %v654 = vunpack.c.h.b16 %v634
          %v655 = vunpack.c.l.b16 %v635
          %v656 = vunpack.c.h.b16 %v635
          %v657 = vunpack.c.l.b16 %v636
          %v658 = vunpack.c.h.b16 %v636
          %v659 = vunpack.c.l.b16 %v637
          %v660 = vunpack.c.h.b16 %v637
          %v661 = vunpack.c.l.b16 %v638
          %v662 = vunpack.c.h.b16 %v638
          %v663 = vpack.c.b16 %v647, %v647
          %v664 = vpack.c.b16 %v648, %v648
          %v665 = vpack.c.b16 %v649, %v649
          %v666 = vpack.c.b16 %v650, %v650
          %v667 = vpack.c.b16 %v651, %v651
          %v668 = vpack.c.b16 %v652, %v652
          %v669 = vpack.c.b16 %v653, %v653
          %v670 = vpack.c.b16 %v654, %v654
          %v671 = vpack.c.b16 %v655, %v655
          %v672 = vpack.c.b16 %v656, %v656
          %v673 = vpack.c.b16 %v657, %v657
          %v674 = vpack.c.b16 %v658, %v658
          %v675 = vpack.c.b16 %v659, %v659
          %v676 = vpack.c.b16 %v660, %v660
          %v677 = vpack.c.b16 %v661, %v661
          %v678 = vpack.c.b16 %v662, %v662
          %695 = vst [vmem:[#allocation2] sm:$0xf] %v663
          %696 = vst [vmem:[#allocation2 + $0x4] sm:$0xf] %v664
          %697 = vst [vmem:[#allocation2 + $0x8] sm:$0xf] %v665
          %698 = vst [vmem:[#allocation2 + $0xc] sm:$0xf] %v666
          %699 = vst [vmem:[#allocation2 + $0x10] sm:$0xf] %v667
          %700 = vst [vmem:[#allocation2 + $0x14] sm:$0xf] %v668
          %701 = vst [vmem:[#allocation2 + $0x18] sm:$0xf] %v669
          %702 = vst [vmem:[#allocation2 + $0x1c] sm:$0xf] %v670
          %703 = vst [vmem:[#allocation2 + $0x20] sm:$0xf] %v671
          %704 = vst [vmem:[#allocation2 + $0x24] sm:$0xf] %v672
          %705 = vst [vmem:[#allocation2 + $0x28] sm:$0xf] %v673
          %706 = vst [vmem:[#allocation2 + $0x2c] sm:$0xf] %v674
          %707 = vst [vmem:[#allocation2 + $0x30] sm:$0xf] %v675
          %708 = vst [vmem:[#allocation2 + $0x34] sm:$0xf] %v676
          %709 = vst [vmem:[#allocation2 + $0x38] sm:$0xf] %v677
          %710 = vst [vmem:[#allocation2 + $0x3c] sm:$0xf] %v678
        $region72: #{tpu_custom_call.1} parent=47 // pred_fallthru
          _
        %v711 = vld [vmem:[%s337] sm:$0xf]
        %v712 = vld [vmem:[#allocation2] sm:$0xf]
        %v713 = vld [vmem:[#allocation2 + $0x4] sm:$0xf]
        %v714 = vld [vmem:[#allocation2 + $0x8] sm:$0xf]
        %v715 = vld [vmem:[#allocation2 + $0xc] sm:$0xf]
        %v716 = vld [vmem:[#allocation2 + $0x10] sm:$0xf]
        %v717 = vld [vmem:[#allocation2 + $0x14] sm:$0xf]
        %v718 = vld [vmem:[#allocation2 + $0x18] sm:$0xf]
        %v719 = vld [vmem:[#allocation2 + $0x1c] sm:$0xf]
        %v720 = vld [vmem:[#allocation2 + $0x20] sm:$0xf]
        %v721 = vld [vmem:[#allocation2 + $0x24] sm:$0xf]
        %v722 = vld [vmem:[#allocation2 + $0x28] sm:$0xf]
        %v723 = vld [vmem:[#allocation2 + $0x2c] sm:$0xf]
        %v724 = vld [vmem:[#allocation2 + $0x30] sm:$0xf]
        %v725 = vld [vmem:[#allocation2 + $0x34] sm:$0xf]
        %v726 = vld [vmem:[#allocation2 + $0x38] sm:$0xf]
        %v727 = vld [vmem:[#allocation2 + $0x3c] sm:$0xf]
        %v744 = vunpack.c.l.b16 %v712
        %v745 = vunpack.c.l.b16 %v713
        %v746 = vunpack.c.l.b16 %v714
        %v747 = vunpack.c.l.b16 %v715
        %v748 = vunpack.c.l.b16 %v716
        %v749 = vunpack.c.l.b16 %v717
        %v750 = vunpack.c.l.b16 %v718
        %v751 = vunpack.c.l.b16 %v719
        %v752 = vunpack.c.l.b16 %v720
        %v753 = vunpack.c.l.b16 %v721
        %v754 = vunpack.c.l.b16 %v722
        %v755 = vunpack.c.l.b16 %v723
        %v756 = vunpack.c.l.b16 %v724
        %v757 = vunpack.c.l.b16 %v725
        %v758 = vunpack.c.l.b16 %v726
        %v759 = vunpack.c.l.b16 %v727
        %v760 = vpack.c.b16 %v745, %v744
        %v761 = vpack.c.b16 %v747, %v746
        %v762 = vpack.c.b16 %v749, %v748
        %v763 = vpack.c.b16 %v751, %v750
        %v764 = vpack.c.b16 %v753, %v752
        %v765 = vpack.c.b16 %v755, %v754
        %v766 = vpack.c.b16 %v757, %v756
        %v767 = vpack.c.b16 %v759, %v758
        %776 = vmatprep.subr.bf16.mxu0 0
        %777 = vmatpush1.bf16.xpose.msra.mxu0 %v767
        %778 = vmatprep.subr.bf16.mxu0 0
        %779 = vmatpush1.bf16.xpose.msra.mxu0 %v766
        %780 = vmatprep.subr.bf16.mxu0 0
        %781 = vmatpush1.bf16.xpose.msra.mxu0 %v765
        %782 = vmatprep.subr.bf16.mxu0 0
        %783 = vmatpush1.bf16.xpose.msra.mxu0 %v764
        %784 = vmatprep.subr.bf16.mxu0 0
        %785 = vmatpush1.bf16.xpose.msra.mxu0 %v763
        %786 = vmatprep.subr.bf16.mxu0 0
        %787 = vmatpush1.bf16.xpose.msra.mxu0 %v762
        %788 = vmatprep.subr.bf16.mxu0 0
        %789 = vmatpush1.bf16.xpose.msra.mxu0 %v761
        %790 = vmatprep.subr.bf16.mxu0 0
        %791 = vmatpush1.bf16.xpose.msra.mxu0 %v760
        %792 = vmatprep.subr.bf16.mxu0 0
        %793 = vmatpush2.bf16.xpose.msra.mxu0 0
        %794 = vmatprep.subr.bf16.mxu0 0
        %795 = vmatpush2.bf16.xpose.msra.mxu0 0
        %796 = vmatprep.subr.bf16.mxu0 0
        %797 = vmatpush2.bf16.xpose.msra.mxu0 0
        %798 = vmatprep.subr.bf16.mxu0 0
        %799 = vmatpush2.bf16.xpose.msra.mxu0 0
        %800 = vmatprep.subr.bf16.mxu0 0
        %801 = vmatpush2.bf16.xpose.msra.mxu0 0
        %802 = vmatprep.subr.bf16.mxu0 0
        %803 = vmatpush2.bf16.xpose.msra.mxu0 0
        %804 = vmatprep.subr.bf16.mxu0 0
        %805 = vmatpush2.bf16.xpose.msra.mxu0 0
        %806 = vmatprep.subr.bf16.mxu0 0
        %807 = vmatpush2.bf16.xpose.msra.mxu0 0
        %808 = vmatprep.mubr.bf16.mxu0 0
        %809 = vmatmul.mubr.bf16.gmra.mxu0 %v711
        %v810 = vpop.f32.mrf.mxu0
        %v811 = vadd.f32 0.0, %v810
        %v812 = vpop.f32.mrf.mxu0
        %v813 = vpop.f32.mrf.mxu0
        %v814 = vpop.f32.mrf.mxu0
        %815 = vdwg.mxu0
        %v816 = vlaneseq
        %v817 = vand.u32 %v816, 127
        %vm818 = vcmp.lt.s32.totalorder %v817, 16
        %v819 = vsel %vm818, 1, 0
        %vm820 = vcmp.eq.s32.totalorder %v819, 1
        %v821 = vsel %vm820, %v811, -1e+30
        %822 = vmax.xlane.f32.xlu0 %v821
        %v823 = vpop.xlane.xlu0 %822
        %v824 = vsub.f32 %v821, %v823
        %v825 = vmul.f32 %v824, 1.442695
        %v826 = vpow.pop %v825
        %827 = vadd.xlane.f32.xlu0 %v826
        %v828 = vpop.xlane.xlu0 %827
        %v829 = vrcp.pop %v828
        %v830 = vmul.f32 %v826, %v829
        %v831 = vpack.c.bf16 %v830, %v830
        %v832 = vld [vmem:[%s346] sm:$0xf]
        %v833 = vld [vmem:[%s346 + $0x4] sm:$0xf]
        %v834 = vld [vmem:[%s346 + $0x8] sm:$0xf]
        %v835 = vld [vmem:[%s346 + $0xc] sm:$0xf]
        %v836 = vld [vmem:[%s346 + $0x10] sm:$0xf]
        %v837 = vld [vmem:[%s346 + $0x14] sm:$0xf]
        %v838 = vld [vmem:[%s346 + $0x18] sm:$0xf]
        %v839 = vld [vmem:[%s346 + $0x1c] sm:$0xf]
        %v840 = vld [vmem:[%s346 + $0x20] sm:$0xf]
        %v841 = vld [vmem:[%s346 + $0x24] sm:$0xf]
        %v842 = vld [vmem:[%s346 + $0x28] sm:$0xf]
        %v843 = vld [vmem:[%s346 + $0x2c] sm:$0xf]
        %v844 = vld [vmem:[%s346 + $0x30] sm:$0xf]
        %v845 = vld [vmem:[%s346 + $0x34] sm:$0xf]
        %v846 = vld [vmem:[%s346 + $0x38] sm:$0xf]
        %v847 = vld [vmem:[%s346 + $0x3c] sm:$0xf]
        %v864 = vunpack.c.l.b16 %v832
        %v865 = vunpack.c.l.b16 %v833
        %v866 = vunpack.c.l.b16 %v834
        %v867 = vunpack.c.l.b16 %v835
        %v868 = vunpack.c.l.b16 %v836
        %v869 = vunpack.c.l.b16 %v837
        %v870 = vunpack.c.l.b16 %v838
        %v871 = vunpack.c.l.b16 %v839
        %v872 = vunpack.c.l.b16 %v840
        %v873 = vunpack.c.l.b16 %v841
        %v874 = vunpack.c.l.b16 %v842
        %v875 = vunpack.c.l.b16 %v843
        %v876 = vunpack.c.l.b16 %v844
        %v877 = vunpack.c.l.b16 %v845
        %v878 = vunpack.c.l.b16 %v846
        %v879 = vunpack.c.l.b16 %v847
        %v880 = vpack.c.b16 %v865, %v864
        %v881 = vpack.c.b16 %v867, %v866
        %v882 = vpack.c.b16 %v869, %v868
        %v883 = vpack.c.b16 %v871, %v870
        %v884 = vpack.c.b16 %v873, %v872
        %v885 = vpack.c.b16 %v875, %v874
        %v886 = vpack.c.b16 %v877, %v876
        %v887 = vpack.c.b16 %v879, %v878
        %896 = vmatprep.subr.bf16.mxu0 0
        %897 = vmatpush1.bf16.msra.mxu0 %v887
        %898 = vmatprep.subr.bf16.mxu0 0
        %899 = vmatpush1.bf16.msra.mxu0 %v886
        %900 = vmatprep.subr.bf16.mxu0 0
        %901 = vmatpush1.bf16.msra.mxu0 %v885
        %902 = vmatprep.subr.bf16.mxu0 0
        %903 = vmatpush1.bf16.msra.mxu0 %v884
        %904 = vmatprep.subr.bf16.mxu0 0
        %905 = vmatpush1.bf16.msra.mxu0 %v883
        %906 = vmatprep.subr.bf16.mxu0 0
        %907 = vmatpush1.bf16.msra.mxu0 %v882
        %908 = vmatprep.subr.bf16.mxu0 0
        %909 = vmatpush1.bf16.msra.mxu0 %v881
        %910 = vmatprep.subr.bf16.mxu0 0
        %911 = vmatpush1.bf16.msra.mxu0 %v880
        %912 = vmatprep.subr.bf16.mxu0 0
        %913 = vmatpush2.bf16.msra.mxu0 0
        %914 = vmatprep.subr.bf16.mxu0 0
        %915 = vmatpush2.bf16.msra.mxu0 0
        %916 = vmatprep.subr.bf16.mxu0 0
        %917 = vmatpush2.bf16.msra.mxu0 0
        %918 = vmatprep.subr.bf16.mxu0 0
        %919 = vmatpush2.bf16.msra.mxu0 0
        %920 = vmatprep.subr.bf16.mxu0 0
        %921 = vmatpush2.bf16.msra.mxu0 0
        %922 = vmatprep.subr.bf16.mxu0 0
        %923 = vmatpush2.bf16.msra.mxu0 0
        %924 = vmatprep.subr.bf16.mxu0 0
        %925 = vmatpush2.bf16.msra.mxu0 0
        %926 = vmatprep.subr.bf16.mxu0 0
        %927 = vmatpush2.bf16.msra.mxu0 0
        %928 = vmatprep.mubr.bf16.mxu0 0
        %929 = vmatmul.mubr.bf16.gmra.mxu0 %v831
        %v930 = vpop.f32.mrf.mxu0
        %v931 = vadd.f32 0.0, %v930
        %v932 = vpop.f32.mrf.mxu0
        %v933 = vpop.f32.mrf.mxu0
        %v934 = vpop.f32.mrf.mxu0
        %935 = vdwg.mxu0
        %v936 = vpack.c.bf16 %v931, %v931
        %v937 = vld [vmem:[#allocation9] sm:$0xf]
        %v938 = vld [vmem:[#allocation9 + $0x4] sm:$0xf]
        %v939 = vld [vmem:[#allocation9 + $0x8] sm:$0xf]
        %v940 = vld [vmem:[#allocation9 + $0xc] sm:$0xf]
        %v941 = vld [vmem:[#allocation9 + $0x10] sm:$0xf]
        %v942 = vld [vmem:[#allocation9 + $0x14] sm:$0xf]
        %v943 = vld [vmem:[#allocation9 + $0x18] sm:$0xf]
        %v944 = vld [vmem:[#allocation9 + $0x1c] sm:$0xf]
        %v945 = vld [vmem:[#allocation9 + $0x20] sm:$0xf]
        %v946 = vld [vmem:[#allocation9 + $0x24] sm:$0xf]
        %v947 = vld [vmem:[#allocation9 + $0x28] sm:$0xf]
        %v948 = vld [vmem:[#allocation9 + $0x2c] sm:$0xf]
        %v949 = vld [vmem:[#allocation9 + $0x30] sm:$0xf]
        %v950 = vld [vmem:[#allocation9 + $0x34] sm:$0xf]
        %v951 = vld [vmem:[#allocation9 + $0x38] sm:$0xf]
        %v952 = vld [vmem:[#allocation9 + $0x3c] sm:$0xf]
        %v953 = vld [vmem:[#allocation11] sm:$0xf]
        %v954 = vld [vmem:[#allocation11 + $0x4] sm:$0xf]
        %v955 = vld [vmem:[#allocation11 + $0x8] sm:$0xf]
        %v956 = vld [vmem:[#allocation11 + $0xc] sm:$0xf]
        %v957 = vld [vmem:[#allocation11 + $0x10] sm:$0xf]
        %v958 = vld [vmem:[#allocation11 + $0x14] sm:$0xf]
        %v959 = vld [vmem:[#allocation11 + $0x18] sm:$0xf]
        %v960 = vld [vmem:[#allocation11 + $0x1c] sm:$0xf]
        %v961 = vld [vmem:[#allocation11 + $0x20] sm:$0xf]
        %v962 = vld [vmem:[#allocation11 + $0x24] sm:$0xf]
        %v963 = vld [vmem:[#allocation11 + $0x28] sm:$0xf]
        %v964 = vld [vmem:[#allocation11 + $0x2c] sm:$0xf]
        %v965 = vld [vmem:[#allocation11 + $0x30] sm:$0xf]
        %v966 = vld [vmem:[#allocation11 + $0x34] sm:$0xf]
        %v967 = vld [vmem:[#allocation11 + $0x38] sm:$0xf]
        %v968 = vld [vmem:[#allocation11 + $0x3c] sm:$0xf]
        %v985 = vunpack.c.l.b16 %v953
        %v986 = vunpack.c.l.b16 %v954
        %v987 = vunpack.c.l.b16 %v955
        %v988 = vunpack.c.l.b16 %v956
        %v989 = vunpack.c.l.b16 %v957
        %v990 = vunpack.c.l.b16 %v958
        %v991 = vunpack.c.l.b16 %v959
        %v992 = vunpack.c.l.b16 %v960
        %v993 = vunpack.c.l.b16 %v961
        %v994 = vunpack.c.l.b16 %v962
        %v995 = vunpack.c.l.b16 %v963
        %v996 = vunpack.c.l.b16 %v964
        %v997 = vunpack.c.l.b16 %v965
        %v998 = vunpack.c.l.b16 %v966
        %v999 = vunpack.c.l.b16 %v967
        %v1000 = vunpack.c.l.b16 %v968
        %v1001 = vpack.c.b16 %v986, %v985
        %v1002 = vpack.c.b16 %v988, %v987
        %v1003 = vpack.c.b16 %v990, %v989
        %v1004 = vpack.c.b16 %v992, %v991
        %v1005 = vpack.c.b16 %v994, %v993
        %v1006 = vpack.c.b16 %v996, %v995
        %v1007 = vpack.c.b16 %v998, %v997
        %v1008 = vpack.c.b16 %v1000, %v999
        %1017 = vmatprep.subr.bf16.mxu0 0
        %1018 = vmatpush1.bf16.msra.mxu0 %v1008
        %1019 = vmatprep.subr.bf16.mxu0 0
        %1020 = vmatpush1.bf16.msra.mxu0 %v1007
        %1021 = vmatprep.subr.bf16.mxu0 0
        %1022 = vmatpush1.bf16.msra.mxu0 %v1006
        %1023 = vmatprep.subr.bf16.mxu0 0
        %1024 = vmatpush1.bf16.msra.mxu0 %v1005
        %1025 = vmatprep.subr.bf16.mxu0 0
        %1026 = vmatpush1.bf16.msra.mxu0 %v1004
        %1027 = vmatprep.subr.bf16.mxu0 0
        %1028 = vmatpush1.bf16.msra.mxu0 %v1003
        %1029 = vmatprep.subr.bf16.mxu0 0
        %1030 = vmatpush1.bf16.msra.mxu0 %v1002
        %1031 = vmatprep.subr.bf16.mxu0 0
        %1032 = vmatpush1.bf16.msra.mxu0 %v1001
        %1033 = vmatprep.subr.bf16.mxu0 0
        %1034 = vmatpush2.bf16.msra.mxu0 0
        %1035 = vmatprep.subr.bf16.mxu0 0
        %1036 = vmatpush2.bf16.msra.mxu0 0
        %1037 = vmatprep.subr.bf16.mxu0 0
        %1038 = vmatpush2.bf16.msra.mxu0 0
        %1039 = vmatprep.subr.bf16.mxu0 0
        %1040 = vmatpush2.bf16.msra.mxu0 0
        %1041 = vmatprep.subr.bf16.mxu0 0
        %1042 = vmatpush2.bf16.msra.mxu0 0
        %1043 = vmatprep.subr.bf16.mxu0 0
        %1044 = vmatpush2.bf16.msra.mxu0 0
        %1045 = vmatprep.subr.bf16.mxu0 0
        %1046 = vmatpush2.bf16.msra.mxu0 0
        %1047 = vmatprep.subr.bf16.mxu0 0
        %1048 = vmatpush2.bf16.msra.mxu0 0
        %1049 = vmatprep.mubr.bf16.mxu0 0
        %1050 = vmatmul.mubr.bf16.gmra.mxu0 %v936
        %v1051 = vpop.f32.mrf.mxu0
        %v1052 = vadd.f32 0.0, %v1051
        %v1053 = vpop.f32.mrf.mxu0
        %v1054 = vpop.f32.mrf.mxu0
        %v1055 = vpop.f32.mrf.mxu0
        %1056 = vdwg.mxu0
        %v1073 = vunpack.c.l.b16 %v937
        %v1074 = vunpack.c.l.b16 %v938
        %v1075 = vunpack.c.l.b16 %v939
        %v1076 = vunpack.c.l.b16 %v940
        %v1077 = vunpack.c.l.b16 %v941
        %v1078 = vunpack.c.l.b16 %v942
        %v1079 = vunpack.c.l.b16 %v943
        %v1080 = vunpack.c.l.b16 %v944
        %v1081 = vunpack.c.l.b16 %v945
        %v1082 = vunpack.c.l.b16 %v946
        %v1083 = vunpack.c.l.b16 %v947
        %v1084 = vunpack.c.l.b16 %v948
        %v1085 = vunpack.c.l.b16 %v949
        %v1086 = vunpack.c.l.b16 %v950
        %v1087 = vunpack.c.l.b16 %v951
        %v1088 = vunpack.c.l.b16 %v952
        %v1089 = vpack.c.b16 %v1074, %v1073
        %v1090 = vpack.c.b16 %v1076, %v1075
        %v1091 = vpack.c.b16 %v1078, %v1077
        %v1092 = vpack.c.b16 %v1080, %v1079
        %v1093 = vpack.c.b16 %v1082, %v1081
        %v1094 = vpack.c.b16 %v1084, %v1083
        %v1095 = vpack.c.b16 %v1086, %v1085
        %v1096 = vpack.c.b16 %v1088, %v1087
        %1105 = vmatprep.subr.bf16.mxu0 0
        %1106 = vmatpush1.bf16.msra.mxu0 %v1096
        %1107 = vmatprep.subr.bf16.mxu0 0
        %1108 = vmatpush1.bf16.msra.mxu0 %v1095
        %1109 = vmatprep.subr.bf16.mxu0 0
        %1110 = vmatpush1.bf16.msra.mxu0 %v1094
        %1111 = vmatprep.subr.bf16.mxu0 0
        %1112 = vmatpush1.bf16.msra.mxu0 %v1093
        %1113 = vmatprep.subr.bf16.mxu0 0
        %1114 = vmatpush1.bf16.msra.mxu0 %v1092
        %1115 = vmatprep.subr.bf16.mxu0 0
        %1116 = vmatpush1.bf16.msra.mxu0 %v1091
        %1117 = vmatprep.subr.bf16.mxu0 0
        %1118 = vmatpush1.bf16.msra.mxu0 %v1090
        %1119 = vmatprep.subr.bf16.mxu0 0
        %1120 = vmatpush1.bf16.msra.mxu0 %v1089
        %1121 = vmatprep.subr.bf16.mxu0 0
        %1122 = vmatpush2.bf16.msra.mxu0 0
        %1123 = vmatprep.subr.bf16.mxu0 0
        %1124 = vmatpush2.bf16.msra.mxu0 0
        %1125 = vmatprep.subr.bf16.mxu0 0
        %1126 = vmatpush2.bf16.msra.mxu0 0
        %1127 = vmatprep.subr.bf16.mxu0 0
        %1128 = vmatpush2.bf16.msra.mxu0 0
        %1129 = vmatprep.subr.bf16.mxu0 0
        %1130 = vmatpush2.bf16.msra.mxu0 0
        %1131 = vmatprep.subr.bf16.mxu0 0
        %1132 = vmatpush2.bf16.msra.mxu0 0
        %1133 = vmatprep.subr.bf16.mxu0 0
        %1134 = vmatpush2.bf16.msra.mxu0 0
        %1135 = vmatprep.subr.bf16.mxu0 0
        %1136 = vmatpush2.bf16.msra.mxu0 0
        %1137 = vmatprep.mubr.bf16.mxu0 0
        %1138 = vmatmul.mubr.bf16.gmra.mxu0 %v711
        %v1139 = vpop.f32.mrf.mxu0
        %v1140 = vadd.f32 %v1052, %v1139
        %v1141 = vpop.f32.mrf.mxu0
        %v1142 = vpop.f32.mrf.mxu0
        %v1143 = vpop.f32.mrf.mxu0
        %1144 = vdwg.mxu0
        %v1145 = vld [vmem:[%s6] sm:$0x1]
        %v1147 = vlaneseq
        %v1148 = vshrl.u32 %v1147, 7
        %v1149 = vsub.s32 0, %v1148
        %v1150 = vrot.slane %v1145, %v1149
        %v1152 = vadd.f32 %v1140, %v1150
        %v1153 = vmul.f32 %v1152, 0.01
        %v1154 = vmax.f32 %v1152, %v1153
        %1155 = vst [vmem:[%s393] sm:$0xff] %v1154
        %s1156 = sand.u32 %s209, 1
        %s1157 = scalar_lea.sflag [#allocation5], %s1156
        %s1158 = sand.u32 %s209, 1
        %s1159 = smul.addr %s1158, 8
        %s1160 = scalar_lea.vmem [#allocation12], %s1159
        // Predicated region
        $region73: #{tpu_custom_call.1} parent=47 // pred_check
          %p1161 = pneg %p219
        $region74: #{tpu_custom_call.1} parent=47 // pred_check_branch
          %1163 = sbr.rel (%p1161) target = $region76
        $region75: #{tpu_custom_call.1} parent=47 // pred_region
          %s1165 = ssub.s32 128, 128
          %1166 = vsyncadd %s1157, %s1165
          %s1167 = sadd.s32 %s33, %s32
          %s1168 = smul.addr %s1167, 128
          %s1169 = scalar_lea.hbm %s7, %s1168
          %s1171 = sshll.u32 %s1160, 4
          %s1172 = int_to_ptr.vmem [resolvable:$true] %s1171
          %1174 = dma.vmem_to_hbm [thread:$0]  %s1172, 128, %s1169, %s1157
        $region76: #{tpu_custom_call.1} parent=47 // pred_fallthru
          _
      $region48: #{tpu_custom_call.1} parent=5 // pred_fallthru
        _
      %p1175 = scmp.le.s32.totalorder 2, %s23
      // Predicated region
      $region77: #{tpu_custom_call.1} parent=5 // pred_check
        %p1176 = pneg %p1175
      $region78: #{tpu_custom_call.1} parent=5 // pred_check_branch
        %1178 = sbr.rel (%p1176) target = $region80
      $region79: #{tpu_custom_call.1} parent=5 // pred_region
        %s1179 = ssub.s32 %s23, 2
        // Predicated region
        $region81: #{tpu_custom_call.1} parent=79 // pred_check
          %p1180 = pneg %p225
        $region82: #{tpu_custom_call.1} parent=79 // pred_check_branch
          %1182 = sbr.rel (%p1180) target = $region84
        $region83: #{tpu_custom_call.1} parent=79 // pred_region
          %s1183 = sand.u32 %s210, 1
          %s1184 = scalar_lea.sflag [#allocation5], %s1183
          %s1185 = sand.u32 %s210, 1
          %s1186 = smul.addr %s1185, 8
          %s1187 = scalar_lea.vmem [#allocation12], %s1186
          %1188 = dma.done %s1184, 128
        $region84: #{tpu_custom_call.1} parent=79 // pred_fallthru
          _
      $region80: #{tpu_custom_call.1} parent=5 // pred_fallthru
        _
    $region6: #{tpu_custom_call.1} parent=1 // loop_footer
      %s27 = sadd.s32 1, %s23
    $region7: #{tpu_custom_call.1} parent=1 // loop_footer_branch
      %22 = sbr.rel target = $region3
    $region8: #{tpu_custom_call.1} parent=1 // loop_exit
      _
    %1189 = vsyncpa [#allocation4], 1
    %s1190 = scalar_lea.sflag [#allocation4], 1
    %1191 = vsyncpa %s1190, 1
    %1192 = vsyncpa [#allocation7], 1
    %s1193 = scalar_lea.sflag [#allocation7], 1
    %1194 = vsyncpa %s1193, 1
    %1195 = vsyncpa [#allocation10], 1
    %1196 = vsyncpa [#allocation5], 1
    %s1197 = scalar_lea.sflag [#allocation5], 1
    %1198 = vsyncpa %s1197, 1

</llo_original>
